<compile_context>
chip_gen: v7x
topology: tpu7x:2x2x1
jax: 0.10.0
libtpu: 0.0.40
codegen_flags: <defaults>
</compile_context>

<pallas_src>
import jax
import jax.numpy as jnp
from jax.experimental import pallas as pl
from jax.experimental.pallas import tpu as pltpu


def simplenet2_kernel(x_ref, w1_ref, w2_ref, packed_ref, out_ref):
    """Fused forward pass.

    x_ref:      (B, F)      bf16
    w1_ref:     (F, HL1)    bf16   (fc1.weight pre-transposed)
    w2_ref:     (HL1, HL2)  bf16   (fc2.weight pre-transposed)
    packed_ref: (8, 128)    f32    row0=b1, row1=b2, row2=fc3 weight row, row3[0]=b3
    out_ref:    (B, 1)      f32
    """
    hl1 = w1_ref.shape[1]
    hl2 = w2_ref.shape[1]

    b1 = packed_ref[0:1, 0:hl1]          # (1, hl1)
    b2 = packed_ref[1:2, 0:hl2]          # (1, hl2)
    w3 = packed_ref[2:3, 0:hl2]          # (1, hl2)  fc3 weight as a row
    b3 = packed_ref[3:4, 0:1]            # (1, 1)

    # Layer 1: MXU matmul (bf16 in, f32 accumulate) + bias + ReLU on the VPU.
    h = jnp.dot(x_ref[...], w1_ref[...], preferred_element_type=jnp.float32)
    h = jnp.maximum(h + b1, 0.0)

    # Layer 2.
    h = jnp.dot(h.astype(jnp.bfloat16), w2_ref[...],
                preferred_element_type=jnp.float32)
    h = jnp.maximum(h + b2, 0.0)

    # Layer 3 (out_features == 1): VPU multiply + XLU lane reduce instead of a
    # 1-column MXU matmul.
    out_ref[...] = jnp.sum(h * w3, axis=-1, keepdims=True) + b3


def pack_small_params(b1, b2, w3_t, b3):
    """Pack the tiny per-layer params into one lane-padded f32 tile (1 DMA)."""
    hl1 = b1.shape[0]
    hl2 = b2.shape[0]
    assert hl1 <= 128 and hl2 <= 128, "packing assumes hidden widths <= 128"
    packed = jnp.zeros((8, 128), jnp.float32)
    packed = packed.at[0, :hl1].set(b1.astype(jnp.float32))
    packed = packed.at[1, :hl2].set(b2.astype(jnp.float32))
    packed = packed.at[2, :hl2].set(w3_t.reshape(-1).astype(jnp.float32))
    packed = packed.at[3, 0].set(jnp.asarray(b3, jnp.float32).reshape(()))
    return packed


def simplenet_forward(x_bf16, w1_bf16, w2_bf16, packed):
    """x_bf16: (B, F) bf16. Returns (B, 1) f32."""
    B = x_bf16.shape[0]
    vmem = pl.BlockSpec(memory_space=pltpu.MemorySpace.VMEM)
    return pl.pallas_call(
        simplenet2_kernel,
        out_shape=jax.ShapeDtypeStruct((B, 1), jnp.float32),
        in_specs=[vmem, vmem, vmem, vmem],
        out_specs=vmem,
    )(x_bf16, w1_bf16, w2_bf16, packed)


def init_params(key, number_of_features, hl1, hl2):
    """Roughly replicates the PyTorch nn.Linear default (Kaiming-uniform) init."""
    ks = jax.random.split(key, 6)

    def lin_w(k, fan_in, fan_out):
        bound = 1.0 / jnp.sqrt(fan_in)
        return jax.random.uniform(k, (fan_in, fan_out), jnp.float32, -bound, bound)

    def lin_b(k, fan_in, fan_out):
        bound = 1.0 / jnp.sqrt(fan_in)
        return jax.random.uniform(k, (fan_out,), jnp.float32, -bound, bound)

    p = {}
    p["w1_t"] = lin_w(ks[0], number_of_features, hl1)   # (F, hl1)
    p["b1"] = lin_b(ks[1], number_of_features, hl1)     # (hl1,)
    p["w2_t"] = lin_w(ks[2], hl1, hl2)                  # (hl1, hl2)
    p["b2"] = lin_b(ks[3], hl1, hl2)                    # (hl2,)
    p["w3_t"] = lin_w(ks[4], hl2, 1)                    # (hl2, 1)
    p["b3"] = lin_b(ks[5], hl2, 1)                      # (1,)
    return p


def reference_forward(x, p):
    """Same numeric recipe as the kernel (bf16 matmul inputs, f32 accumulate)."""
    h = jnp.dot(x.astype(jnp.bfloat16), p["w1_t"].astype(jnp.bfloat16),
                preferred_element_type=jnp.float32) + p["b1"][None, :]
    h = jnp.maximum(h, 0.0)
    h = jnp.dot(h.astype(jnp.bfloat16), p["w2_t"].astype(jnp.bfloat16),
                preferred_element_type=jnp.float32) + p["b2"][None, :]
    h = jnp.maximum(h, 0.0)
    return h @ p["w3_t"] + p["b3"][None, :]


if __name__ == "__main__":
    key = jax.random.PRNGKey(0)
    k_x, k_p = jax.random.split(key)

    number_of_features, hl1, hl2 = 32, 64, 64
    batch = 16

    x = jax.random.normal(k_x, (batch, number_of_features), jnp.float32)
    params = init_params(k_p, number_of_features, hl1, hl2)

    # One-time host-side parameter prep (done once, not per forward call).
    x_bf = x.astype(jnp.bfloat16)
    w1_bf = params["w1_t"].astype(jnp.bfloat16)
    w2_bf = params["w2_t"].astype(jnp.bfloat16)
    packed = pack_small_params(params["b1"], params["b2"],
                               params["w3_t"], params["b3"])

    out = simplenet_forward(x_bf, w1_bf, w2_bf, packed)
    out = jax.block_until_ready(out)

    ref = reference_forward(x, params)
    assert out.shape == (batch, 1)
    assert jnp.allclose(out, ref, atol=1e-3, rtol=1e-3), "mismatch vs JAX reference"

    print("KERNEL_OK")
</pallas_src>

<mosaic_0001>
module attributes {stable_mosaic.version = 11 : i64} {
  func.func @simplenet2_kernel(%arg0: memref<16x32xbf16, #tpu.memory_space<vmem>>, %arg1: memref<32x64xbf16, #tpu.memory_space<vmem>>, %arg2: memref<64x64xbf16, #tpu.memory_space<vmem>>, %arg3: memref<8x128xf32, #tpu.memory_space<vmem>>, %arg4: memref<16x1xf32, #tpu.memory_space<vmem>>) attributes {dimension_semantics = [], scalar_prefetch = 0 : i64, scratch_operands = 0 : i64, tpu.core_type = #tpu.core_type<tc>} {
    %c0 = arith.constant 0 : index
    %c0_0 = arith.constant 0 : index
    %0 = vector.load %arg3[%c0, %c0_0] : memref<8x128xf32, #tpu.memory_space<vmem>>, vector<1x64xf32>
    %c1 = arith.constant 1 : index
    %c0_1 = arith.constant 0 : index
    %1 = vector.load %arg3[%c1, %c0_1] : memref<8x128xf32, #tpu.memory_space<vmem>>, vector<1x64xf32>
    %c2 = arith.constant 2 : index
    %c0_2 = arith.constant 0 : index
    %2 = vector.load %arg3[%c2, %c0_2] : memref<8x128xf32, #tpu.memory_space<vmem>>, vector<1x64xf32>
    %c3 = arith.constant 3 : index
    %c0_3 = arith.constant 0 : index
    %3 = vector.load %arg3[%c3, %c0_3] : memref<8x128xf32, #tpu.memory_space<vmem>>, vector<1x1xf32>
    %c0_4 = arith.constant 0 : index
    %c0_5 = arith.constant 0 : index
    %4 = vector.load %arg0[%c0_4, %c0_5] : memref<16x32xbf16, #tpu.memory_space<vmem>>, vector<16x32xbf16>
    %c0_6 = arith.constant 0 : index
    %c0_7 = arith.constant 0 : index
    %5 = vector.load %arg1[%c0_6, %c0_7] : memref<32x64xbf16, #tpu.memory_space<vmem>>, vector<32x64xbf16>
    %cst = arith.constant dense<0.000000e+00> : vector<16x64xf32>
    %6 = tpu.matmul %4, %5, %cst {dimension_numbers = #tpu.dot_dimension_numbers<[1], [0], [0], [1], [0, 0, 1, 1], [], []>} : vector<16x32xbf16>, vector<32x64xbf16>, vector<16x64xf32> -> vector<16x64xf32>
    %7 = vector.broadcast %0 : vector<1x64xf32> to vector<16x64xf32>
    %8 = arith.addf %6, %7 : vector<16x64xf32>
    %cst_8 = arith.constant 0.000000e+00 : f32
    %9 = vector.broadcast %cst_8 : f32 to vector<16x64xf32>
    %10 = arith.maximumf %8, %9 : vector<16x64xf32>
    %11 = arith.truncf %10 : vector<16x64xf32> to vector<16x64xbf16>
    %c0_9 = arith.constant 0 : index
    %c0_10 = arith.constant 0 : index
    %12 = vector.load %arg2[%c0_9, %c0_10] : memref<64x64xbf16, #tpu.memory_space<vmem>>, vector<64x64xbf16>
    %cst_11 = arith.constant dense<0.000000e+00> : vector<16x64xf32>
    %13 = tpu.matmul %11, %12, %cst_11 {dimension_numbers = #tpu.dot_dimension_numbers<[1], [0], [0], [1], [0, 0, 1, 1], [], []>} : vector<16x64xbf16>, vector<64x64xbf16>, vector<16x64xf32> -> vector<16x64xf32>
    %14 = vector.broadcast %1 : vector<1x64xf32> to vector<16x64xf32>
    %15 = arith.addf %13, %14 : vector<16x64xf32>
    %cst_12 = arith.constant 0.000000e+00 : f32
    %16 = vector.broadcast %cst_12 : f32 to vector<16x64xf32>
    %17 = arith.maximumf %15, %16 : vector<16x64xf32>
    %18 = vector.broadcast %2 : vector<1x64xf32> to vector<16x64xf32>
    %19 = arith.mulf %17, %18 : vector<16x64xf32>
    %cst_13 = arith.constant dense<0.000000e+00> : vector<16xf32>
    %20 = vector.multi_reduction <add>, %19, %cst_13 [1] : vector<16x64xf32> to vector<16xf32>
    %21 = vector.shape_cast %20 : vector<16xf32> to vector<16x1xf32>
    %22 = vector.broadcast %3 : vector<1x1xf32> to vector<16x1xf32>
    %23 = arith.addf %21, %22 : vector<16x1xf32>
    %c0_14 = arith.constant 0 : index
    %c0_15 = arith.constant 0 : index
    %24 = vector.load %arg4[%c0_14, %c0_15] : memref<16x1xf32, #tpu.memory_space<vmem>>, vector<16x1xf32>
    tpu.vector_store %arg4[%c0_14, %c0_15], %23 {strides = array<i32>} : memref<16x1xf32, #tpu.memory_space<vmem>>, vector<16x1xf32>,
    return
  }
}

</mosaic_0001>

<llo_original>
// kernel: tpu_custom_call.1
$region0: #{tpu_custom_call.1}
  #allocation0 [shape = 'u32[]', space=smem, size = 0x4, offset = 0x4, fixed_abs, tag = 'smem constant byte address 0x4 - core index']
  #allocation1 [shape = 'u32[144,128]{1,0:T(1,128)}', space=vmem, size = 0x12000, scoped, tag = 'internal scratch']
  %s0 = inlined_call_operand.hbm [shape: bf16[16,32], index: 0, kind: input, shape index: {}]
  %s1 = inlined_call_operand.hbm [shape: bf16[32,64], index: 1, kind: input, shape index: {}]
  %s2 = inlined_call_operand.hbm [shape: bf16[64,64], index: 2, kind: input, shape index: {}]
  %s3 = inlined_call_operand.vmem [shape: f32[8,128], index: 3, kind: input, shape index: {}]
  %s4 = inlined_call_operand.vmem [shape: f32[16,1], index: 4, kind: output, shape index: {}]
  %s5 = sld [smem:[#allocation0]]
  $region38: #{tpu_custom_call.1} parent=0
    _
  %s7 = ssub.s32 1, %s5
  %s8 = scalar_select 0, %s7, %s5
  $region1: #{tpu_custom_call.1} parent=0
    #allocation2 [shape = 'u8[4096]{0}', space=vmem, size = 0x1000, scoped, tag = 'input window, operand 0, single buffered']
    #allocation3 [shape = 's32[1]{0}', space=sflag, size = 0x4, scoped, tag = 'scoped memory for tpu_custom_call.1']
    #allocation4 [shape = 'u8[8192]{0}', space=vmem, size = 0x2000, scoped, tag = 'input window, operand 1, single buffered']
    #allocation5 [shape = 's32[1]{0}', space=sflag, size = 0x4, scoped, tag = 'scoped memory for tpu_custom_call.1']
    #allocation6 [shape = 'u8[16384]{0}', space=vmem, size = 0x4000, scoped, tag = 'input window, operand 2, single buffered']
    %9 = vsyncpa [#allocation3], 0
    %10 = vsyncpa [#allocation5], 0
    // Predicated region
    $region2: #{tpu_custom_call.1} parent=1 // pred_check
      _
    $region3: #{tpu_custom_call.1} parent=1 // pred_check_branch
      %12 = sbr.rel (0) target = $region5
    $region4: #{tpu_custom_call.1} parent=1 // pred_region
      %s14 = ssub.s32 128, 128
      %15 = vsyncadd [#allocation3], %s14
      %s16 = sshll.u32 [#allocation2], 4
      %s17 = int_to_ptr.vmem [resolvable:$true] %s16
      %22 = dma.hbm_to_vmem [thread:$0]  %s0, 128, %s17, [#allocation3], 64, 64, 4
    $region5: #{tpu_custom_call.1} parent=1 // pred_fallthru
      _
    // Predicated region
    $region6: #{tpu_custom_call.1} parent=1 // pred_check
      _
    $region7: #{tpu_custom_call.1} parent=1 // pred_check_branch
      %24 = sbr.rel (0) target = $region9
    $region8: #{tpu_custom_call.1} parent=1 // pred_region
      %s26 = ssub.s32 256, 256
      %27 = vsyncadd [#allocation5], %s26
      %s28 = sshll.u32 [#allocation4], 4
      %s29 = int_to_ptr.vmem [resolvable:$true] %s28
      %34 = dma.hbm_to_vmem [thread:$0]  %s1, 256, %s29, [#allocation5], 64, 64, 4
    $region9: #{tpu_custom_call.1} parent=1 // pred_fallthru
      _
    // Predicated region
    $region10: #{tpu_custom_call.1} parent=1 // pred_check
      _
    $region11: #{tpu_custom_call.1} parent=1 // pred_check_branch
      %36 = sbr.rel (0) target = $region13
    $region12: #{tpu_custom_call.1} parent=1 // pred_region
      %s38 = ssub.s32 512, 512
      %39 = vsyncadd [#allocation5], %s38
      %s40 = sshll.u32 [#allocation6], 4
      %s41 = int_to_ptr.vmem [resolvable:$true] %s40
      %46 = dma.hbm_to_vmem [thread:$0]  %s2, 512, %s41, [#allocation5], 64, 64, 4
    $region13: #{tpu_custom_call.1} parent=1 // pred_fallthru
      _
    // Predicated region
    $region14: #{tpu_custom_call.1} parent=1 // pred_check
      _
    $region15: #{tpu_custom_call.1} parent=1 // pred_check_branch
      %48 = sbr.rel (0) target = $region17
    $region16: #{tpu_custom_call.1} parent=1 // pred_region
      _
    $region17: #{tpu_custom_call.1} parent=1 // pred_fallthru
      _
    // Predicated region
    $region18: #{tpu_custom_call.1} parent=1 // pred_check
      _
    $region19: #{tpu_custom_call.1} parent=1 // pred_check_branch
      %50 = sbr.rel (0) target = $region21
    $region20: #{tpu_custom_call.1} parent=1 // pred_region
      %51 = dma.done [#allocation3], 128
    $region21: #{tpu_custom_call.1} parent=1 // pred_fallthru
      _
    // Predicated region
    $region22: #{tpu_custom_call.1} parent=1 // pred_check
      _
    $region23: #{tpu_custom_call.1} parent=1 // pred_check_branch
      %53 = sbr.rel (0) target = $region25
    $region24: #{tpu_custom_call.1} parent=1 // pred_region
      %54 = dma.done [#allocation5], 256
    $region25: #{tpu_custom_call.1} parent=1 // pred_fallthru
      _
    // Predicated region
    $region26: #{tpu_custom_call.1} parent=1 // pred_check
      _
    $region27: #{tpu_custom_call.1} parent=1 // pred_check_branch
      %56 = sbr.rel (0) target = $region29
    $region28: #{tpu_custom_call.1} parent=1 // pred_region
      %57 = dma.done [#allocation5], 512
    $region29: #{tpu_custom_call.1} parent=1 // pred_fallthru
      _
    %v59 = vld [vmem:[%s3] sm:$0x1]
    %v60 = vld [vmem:[%s3 + $0x1] sm:$0x1]
    %v61 = vld [vmem:[%s3 + $0x2] sm:$0x1]
    %v62 = vld [vmem:[%s3 + $0x3] sm:$0x1]
    %v63 = vld [vmem:[#allocation2] sm:$0xf]
    %v64 = vld [vmem:[#allocation2 + $0x4] sm:$0xf]
    %v65 = vld [vmem:[#allocation4] sm:$0xf]
    %v66 = vld [vmem:[#allocation4 + $0x4] sm:$0xf]
    %v67 = vld [vmem:[#allocation4 + $0x8] sm:$0xf]
    %v68 = vld [vmem:[#allocation4 + $0xc] sm:$0xf]
    %v69 = vlaneseq
    %v70 = vshrl.u32 %v69, 7
    %v71 = vsub.s32 0, %v70
    %v72 = vrot.slane %v59, %v71
    %v75 = vunpack.c.l.b16 %v63
    %v76 = vunpack.c.l.b16 %v64
    %v77 = vpack.c.b16 %v76, %v75
    %v82 = vunpack.c.l.b16 %v65
    %v83 = vunpack.c.l.b16 %v66
    %v84 = vunpack.c.l.b16 %v67
    %v85 = vunpack.c.l.b16 %v68
    %v86 = vpack.c.b16 %v83, %v82
    %v87 = vpack.c.b16 %v85, %v84
    %vm90 = vcmask 261120
    %v92 = vsel %vm90, %v77, 0
    %94 = vmatprep.subr.bf16.mxu0 0
    %95 = vmatpush1.bf16.msra.mxu0 %v86
    %96 = vmatprep.subr.bf16.mxu0 0
    %97 = vmatpush1.bf16.msra.mxu0 %v87
    %98 = vmatprep.subr.bf16.mxu0 0
    %99 = vmatpush1.bf16.msra.mxu0 0
    %100 = vmatprep.subr.bf16.mxu0 0
    %101 = vmatpush1.bf16.msra.mxu0 0
    %102 = vmatprep.subr.bf16.mxu0 0
    %103 = vmatpush1.bf16.msra.mxu0 0
    %104 = vmatprep.subr.bf16.mxu0 0
    %105 = vmatpush1.bf16.msra.mxu0 0
    %106 = vmatprep.subr.bf16.mxu0 0
    %107 = vmatpush1.bf16.msra.mxu0 0
    %108 = vmatprep.subr.bf16.mxu0 0
    %109 = vmatpush1.bf16.msra.mxu0 0
    %110 = vmatprep.subr.bf16.mxu0 0
    %111 = vmatpush1.bf16.msra.mxu0 0
    %112 = vmatprep.subr.bf16.mxu0 0
    %113 = vmatpush1.bf16.msra.mxu0 0
    %114 = vmatprep.subr.bf16.mxu0 0
    %115 = vmatpush1.bf16.msra.mxu0 0
    %116 = vmatprep.subr.bf16.mxu0 0
    %117 = vmatpush1.bf16.msra.mxu0 0
    %118 = vmatprep.subr.bf16.mxu0 0
    %119 = vmatpush1.bf16.msra.mxu0 0
    %120 = vmatprep.subr.bf16.mxu0 0
    %121 = vmatpush1.bf16.msra.mxu0 0
    %122 = vmatprep.subr.bf16.mxu0 0
    %123 = vmatpush1.bf16.msra.mxu0 0
    %124 = vmatprep.subr.bf16.mxu0 0
    %125 = vmatpush1.bf16.msra.mxu0 0
    %126 = vmatprep.mubr.bf16.mxu0 0
    %127 = vmatmul.mubr.bf16.gmra.mrb[0].mxu0 %v92
    %v128 = vpop.f32.mrb[0].mxu0
    %v129 = vadd.f32 %v72, %v128
    %v130 = vpop.f32.mrb[0].mxu0
    %v131 = vpop.f32.mrb[0].mxu0
    %v132 = vadd.f32 %v72, %v131
    %v133 = vpop.f32.mrb[0].mxu0
    %134 = vdwg.mxu0
    %v135 = vmax.f32 %v129, 0.0
    %v136 = vmax.f32 %v132, 0.0
    %v137 = vpack.c.bf16 %v136, %v135
    %v138 = vld [vmem:[#allocation6] sm:$0xf]
    %v139 = vld [vmem:[#allocation6 + $0x4] sm:$0xf]
    %v140 = vld [vmem:[#allocation6 + $0x8] sm:$0xf]
    %v141 = vld [vmem:[#allocation6 + $0xc] sm:$0xf]
    %v142 = vld [vmem:[#allocation6 + $0x10] sm:$0xf]
    %v143 = vld [vmem:[#allocation6 + $0x14] sm:$0xf]
    %v144 = vld [vmem:[#allocation6 + $0x18] sm:$0xf]
    %v145 = vld [vmem:[#allocation6 + $0x1c] sm:$0xf]
    %v146 = vlaneseq
    %v147 = vshrl.u32 %v146, 7
    %v148 = vsub.s32 0, %v147
    %v149 = vrot.slane %v60, %v148
    %v158 = vunpack.c.l.b16 %v138
    %v159 = vunpack.c.l.b16 %v139
    %v160 = vunpack.c.l.b16 %v140
    %v161 = vunpack.c.l.b16 %v141
    %v162 = vunpack.c.l.b16 %v142
    %v163 = vunpack.c.l.b16 %v143
    %v164 = vunpack.c.l.b16 %v144
    %v165 = vunpack.c.l.b16 %v145
    %v166 = vpack.c.b16 %v159, %v158
    %v167 = vpack.c.b16 %v161, %v160
    %v168 = vpack.c.b16 %v163, %v162
    %v169 = vpack.c.b16 %v165, %v164
    %vm174 = vcmask 523264
    %v176 = vsel %vm174, %v137, 0
    %178 = vmatprep.subr.bf16.mxu0 0
    %179 = vmatpush1.bf16.msra.mxu0 %v166
    %180 = vmatprep.subr.bf16.mxu0 0
    %181 = vmatpush1.bf16.msra.mxu0 %v167
    %182 = vmatprep.subr.bf16.mxu0 0
    %183 = vmatpush1.bf16.msra.mxu0 %v168
    %184 = vmatprep.subr.bf16.mxu0 0
    %185 = vmatpush1.bf16.msra.mxu0 %v169
    %186 = vmatprep.subr.bf16.mxu0 0
    %187 = vmatpush1.bf16.msra.mxu0 0
    %188 = vmatprep.subr.bf16.mxu0 0
    %189 = vmatpush1.bf16.msra.mxu0 0
    %190 = vmatprep.subr.bf16.mxu0 0
    %191 = vmatpush1.bf16.msra.mxu0 0
    %192 = vmatprep.subr.bf16.mxu0 0
    %193 = vmatpush1.bf16.msra.mxu0 0
    %194 = vmatprep.subr.bf16.mxu0 0
    %195 = vmatpush1.bf16.msra.mxu0 0
    %196 = vmatprep.subr.bf16.mxu0 0
    %197 = vmatpush1.bf16.msra.mxu0 0
    %198 = vmatprep.subr.bf16.mxu0 0
    %199 = vmatpush1.bf16.msra.mxu0 0
    %200 = vmatprep.subr.bf16.mxu0 0
    %201 = vmatpush1.bf16.msra.mxu0 0
    %202 = vmatprep.subr.bf16.mxu0 0
    %203 = vmatpush1.bf16.msra.mxu0 0
    %204 = vmatprep.subr.bf16.mxu0 0
    %205 = vmatpush1.bf16.msra.mxu0 0
    %206 = vmatprep.subr.bf16.mxu0 0
    %207 = vmatpush1.bf16.msra.mxu0 0
    %208 = vmatprep.subr.bf16.mxu0 0
    %209 = vmatpush1.bf16.msra.mxu0 0
    %210 = vmatprep.mubr.bf16.mxu0 0
    %211 = vmatmul.mubr.bf16.gmra.mrb[0].mxu0 %v176
    %v212 = vpop.f32.mrb[0].mxu0
    %v213 = vadd.f32 %v149, %v212
    %v214 = vpop.f32.mrb[0].mxu0
    %v215 = vpop.f32.mrb[0].mxu0
    %v216 = vadd.f32 %v149, %v215
    %v217 = vpop.f32.mrb[0].mxu0
    %218 = vdwg.mxu0
    %v219 = vmax.f32 %v213, 0.0
    %v220 = vmax.f32 %v216, 0.0
    %v221 = vlaneseq
    %v222 = vshrl.u32 %v221, 7
    %v223 = vsub.s32 0, %v222
    %v224 = vrot.slane %v61, %v223
    %v225 = vmul.f32 %v219, %v224
    %v226 = vmul.f32 %v220, %v224
    %v227 = vsel %vm174, %v225, 0.0
    %228 = vadd.xlane.f32.xlu0 %v227
    %v229 = vpop.xlane.xlu0 %228
    %v230 = vsel %vm174, %v226, 0.0
    %231 = vadd.xlane.f32.xlu0 %v230
    %v232 = vpop.xlane.xlu0 %231
    %v233 = vlaneseq
    %v234 = vshrl.u32 %v233, 7
    %v235 = vsub.s32 0, %v234
    %v236 = vrot.slane %v62, %v235
    %v237 = vadd.f32 %v229, %v236
    %v238 = vadd.f32 %v232, %v236
    %vm239 = vcmask 7168
    %240 = vst.msk [vmem:[%s4] sm:$0xff] %vm239, %v237
    %241 = vst.msk [vmem:[%s4 + $0x8] sm:$0xff] %vm239, %v238
    // Predicated region
    $region30: #{tpu_custom_call.1} parent=1 // pred_check
      _
    $region31: #{tpu_custom_call.1} parent=1 // pred_check_branch
      %243 = sbr.rel (0) target = $region33
    $region32: #{tpu_custom_call.1} parent=1 // pred_region
      _
    $region33: #{tpu_custom_call.1} parent=1 // pred_fallthru
      _
    // Predicated region
    $region34: #{tpu_custom_call.1} parent=1 // pred_check
      _
    $region35: #{tpu_custom_call.1} parent=1 // pred_check_branch
      %245 = sbr.rel (0) target = $region37
    $region36: #{tpu_custom_call.1} parent=1 // pred_region
      _
    $region37: #{tpu_custom_call.1} parent=1 // pred_fallthru
      _
    %246 = vsyncpa [#allocation3], 1
    %247 = vsyncpa [#allocation5], 1

</llo_original>
